<compile_context>
chip_gen: v5e
topology: v5e:2x2
jax: 0.10.0
libtpu: 0.0.40
codegen_flags: <defaults>
</compile_context>

<pallas_src>
import jax
import jax.numpy as jnp
from jax.experimental import pallas as pl
from jax.experimental.pallas import tpu as pltpu

EPS = 1e-6
_VMEM_LIMIT_BYTES = 32 * 1024 * 1024      # explicit scoped-VMEM limit (safe on v5e/v6e/v7x)
_TILE_BUDGET_BYTES = 20 * 1024 * 1024     # budget for the double-buffered x/out tiles
_MAX_TILE = 4096
_MIN_TILE = 512                           # >= 2 KiB DMA rows for f32


def _l2norm_scale_kernel(x_ref, w_ref, b_ref, o_ref):
    # x_ref/o_ref: (C, TILE_HW) native dtype ; w_ref/b_ref: (C, 1) f32
    x = x_ref[...].astype(jnp.float32)
    # L2 norm over the channel (sublane) axis; eps added AFTER sqrt, matching
    # torch.norm(2, dim=1, keepdim=True) + eps.
    norm = jnp.sqrt(jnp.sum(x * x, axis=0, keepdims=True)) + EPS          # (1, TILE_HW)
    # EUP approximate reciprocal + one Newton-Raphson refinement: the (1, TILE_HW)
    # reciprocal sits in the free EUP slot; replaces C x TILE_HW divides with a
    # broadcast multiply while keeping ~1e-7 relative error.
    inv = pl.reciprocal(norm, approx=True)
    inv = inv * (2.0 - norm * inv)
    # y = x_norm * weight + bias  ==  x * (weight * inv) + bias
    o_ref[...] = (x * (w_ref[...] * inv) + b_ref[...]).astype(o_ref.dtype)


def _pick_tile_hw(C, HW, N, itemsize):
    """Lane-tile width: largest multiple of 128 that fits the VMEM budget."""
    # Sublane padding of the channel axis (8 rows/vreg for 32-bit, 16 for 16-bit, ...).
    sub = 8 * (4 // max(itemsize, 1)) if itemsize <= 4 else 8
    c_pad = pl.cdiv(C, sub) * sub
    # w/b tiles live in VMEM too: each pads to (ceil(C/8)*8, 128) f32, double-buffered.
    wb_bytes = 2 * 2 * (pl.cdiv(C, 8) * 8) * 128 * 4
    budget = max(_TILE_BUDGET_BYTES - wb_bytes, 1024 * 1024)
    # Pipelined footprint ~= 2 input bufs + 2 output bufs = 4 * c_pad * tile * itemsize.
    per_lane_bytes = 4 * c_pad * itemsize
    tile = (budget // per_lane_bytes) // 128 * 128
    tile = max(_MIN_TILE, min(_MAX_TILE, tile))

    hw128 = pl.cdiv(HW, 128) * 128
    tile = min(tile, hw128)

    # v7x megacore balance: with N == 1, make sure there are >= 2 hw tiles so the
    # second TensorCore is not idle (when HW is large enough to split).
    if N == 1:
        while pl.cdiv(hw128, tile) < 2 and tile > _MIN_TILE:
            tile = max(_MIN_TILE, (tile // 2) // 128 * 128)

    return max(tile, 128)


def l2norm(x_nchw, weight_c, bias_c):
    """x_nchw: (N, C, H, W); weight_c/bias_c: (C,). Returns (N, C, H, W)."""
    N, C, H, W = x_nchw.shape
    HW = H * W
    x_flat = x_nchw.reshape(N, C, HW)              # contiguous collapse, no copy / no cast

    tile_hw = _pick_tile_hw(C, HW, N, x_flat.dtype.itemsize)
    hw_tiles = pl.cdiv(HW, tile_hw)                # partial edge block handled by Pallas

    w = weight_c.reshape(C, 1).astype(jnp.float32)
    b = bias_c.reshape(C, 1).astype(jnp.float32)

    out_flat = pl.pallas_call(
        _l2norm_scale_kernel,
        out_shape=jax.ShapeDtypeStruct((N, C, HW), x_flat.dtype),
        grid_spec=pltpu.PrefetchScalarGridSpec(
            num_scalar_prefetch=0,
            grid=(N, hw_tiles),
            in_specs=[
                pl.BlockSpec((pl.Squeezed(), C, tile_hw), lambda n, h: (n, 0, h)),
                pl.BlockSpec((C, 1), lambda n, h: (0, 0)),
                pl.BlockSpec((C, 1), lambda n, h: (0, 0)),
            ],
            out_specs=pl.BlockSpec((pl.Squeezed(), C, tile_hw), lambda n, h: (n, 0, h)),
        ),
        compiler_params=pltpu.CompilerParams(
            dimension_semantics=("parallel", "parallel"),
            vmem_limit_bytes=_VMEM_LIMIT_BYTES,
        ),
    )(x_flat, w, b)

    return out_flat.reshape(N, C, H, W)


def l2norm_reference(x, weight_c, bias_c):
    xf = x.astype(jnp.float32)
    norm = jnp.sqrt(jnp.sum(xf * xf, axis=1, keepdims=True)) + EPS
    xn = xf / norm
    y = xn * weight_c.reshape(1, -1, 1, 1) + bias_c.reshape(1, -1, 1, 1)
    return y.astype(x.dtype)


if __name__ == "__main__":
    key = jax.random.PRNGKey(0)

    # Parameters as in L2Norm.__init__ -> Scale.reset_parameters:
    # weight filled with init_scale=1.0, bias filled with 0.0 (deterministic).
    def params(C):
        return (jnp.full((C,), 1.0, dtype=jnp.float32),
                jnp.full((C,), 0.0, dtype=jnp.float32))

    # Case 1: small NCHW, f32, HW a multiple of 128.
    N, C, H, W = 2, 4, 16, 16
    x = jax.random.normal(key, (N, C, H, W), dtype=jnp.float32)
    weight, bias = params(C)
    y = l2norm(x, weight, bias)
    jax.block_until_ready(y)
    y_ref = l2norm_reference(x, weight, bias)
    assert y.shape == (N, C, H, W)
    assert jnp.allclose(y, y_ref, atol=1e-5, rtol=1e-5)

    # Case 2: HW not a multiple of 128 (exercises the masked edge block, no pad/slice).
    N2, C2, H2, W2 = 1, 4, 19, 19
    x2 = jax.random.normal(jax.random.PRNGKey(1), (N2, C2, H2, W2), dtype=jnp.float32)
    w2, b2 = params(C2)
    y2 = l2norm(x2, w2, b2)
    jax.block_until_ready(y2)
    assert jnp.allclose(y2, l2norm_reference(x2, w2, b2), atol=1e-5, rtol=1e-5)

    # Case 3: bf16 activations stay bf16 on the wire (f32 math inside the kernel).
    x3 = jax.random.normal(jax.random.PRNGKey(2), (2, 8, 16, 16), dtype=jnp.bfloat16)
    w3, b3 = params(8)
    y3 = l2norm(x3, w3, b3)
    jax.block_until_ready(y3)
    assert y3.dtype == jnp.bfloat16
    assert jnp.allclose(y3.astype(jnp.float32),
                        l2norm_reference(x3, w3, b3).astype(jnp.float32),
                        atol=2e-2, rtol=2e-2)

    print("KERNEL_OK")
</pallas_src>

<mosaic_0001>
module attributes {stable_mosaic.version = 11 : i64} {
  func.func @_l2norm_scale_kernel(%arg0: i32, %arg1: i32, %arg2: memref<1x4x256xf32, #tpu.memory_space<vmem>>, %arg3: memref<4x1xf32, #tpu.memory_space<vmem>>, %arg4: memref<4x1xf32, #tpu.memory_space<vmem>>, %arg5: memref<1x4x256xf32, #tpu.memory_space<vmem>>) attributes {dimension_semantics = [#tpu.dimension_semantics<parallel>, #tpu.dimension_semantics<parallel>], iteration_bounds = array<i64: 2, 1>, scalar_prefetch = 0 : i64, scratch_operands = 0 : i64, tpu.core_type = #tpu.core_type<tc>, window_params = [{transform_indices = @transform_0, window_bounds = array<i64: 1, 4, 256>}, {pipeline_mode = #tpu.pipeline_mode<synchronous>, transform_indices = @transform_1, window_bounds = array<i64: 4, 1>}, {pipeline_mode = #tpu.pipeline_mode<synchronous>, transform_indices = @transform_2, window_bounds = array<i64: 4, 1>}, {transform_indices = @transform_3, window_bounds = array<i64: 1, 4, 256>}]} {
    %c0 = arith.constant 0 : index
    %c0_0 = arith.constant 0 : index
    %c0_1 = arith.constant 0 : index
    %0 = vector.load %arg2[%c0, %c0_0, %c0_1] : memref<1x4x256xf32, #tpu.memory_space<vmem>>, vector<1x4x256xf32>
    %1 = vector.shape_cast %0 : vector<1x4x256xf32> to vector<4x256xf32>
    %2 = arith.mulf %1, %1 : vector<4x256xf32>
    %cst = arith.constant dense<0.000000e+00> : vector<256xf32>
    %3 = vector.multi_reduction <add>, %2, %cst [0] : vector<4x256xf32> to vector<256xf32>
    %4 = vector.shape_cast %3 : vector<256xf32> to vector<1x256xf32>
    %5 = math.sqrt %4 : vector<1x256xf32>
    %cst_2 = arith.constant 9.99999997E-7 : f32
    %6 = vector.broadcast %cst_2 : f32 to vector<1x256xf32>
    %7 = arith.addf %5, %6 : vector<1x256xf32>
    %8 = tpu.reciprocal %7 {approx = true} : vector<1x256xf32> -> vector<1x256xf32>
    %9 = arith.mulf %7, %8 : vector<1x256xf32>
    %cst_3 = arith.constant 2.000000e+00 : f32
    %10 = vector.broadcast %cst_3 : f32 to vector<1x256xf32>
    %11 = arith.subf %10, %9 : vector<1x256xf32>
    %12 = arith.mulf %8, %11 : vector<1x256xf32>
    %c0_4 = arith.constant 0 : index
    %c0_5 = arith.constant 0 : index
    %13 = vector.load %arg3[%c0_4, %c0_5] : memref<4x1xf32, #tpu.memory_space<vmem>>, vector<4x1xf32>
    %14 = vector.broadcast %13 : vector<4x1xf32> to vector<4x256xf32>
    %15 = vector.broadcast %12 : vector<1x256xf32> to vector<4x256xf32>
    %16 = arith.mulf %14, %15 : vector<4x256xf32>
    %17 = arith.mulf %1, %16 : vector<4x256xf32>
    %c0_6 = arith.constant 0 : index
    %c0_7 = arith.constant 0 : index
    %18 = vector.load %arg4[%c0_6, %c0_7] : memref<4x1xf32, #tpu.memory_space<vmem>>, vector<4x1xf32>
    %19 = vector.broadcast %18 : vector<4x1xf32> to vector<4x256xf32>
    %20 = arith.addf %17, %19 : vector<4x256xf32>
    %c0_8 = arith.constant 0 : index
    %c0_9 = arith.constant 0 : index
    %c0_10 = arith.constant 0 : index
    %21 = vector.load %arg5[%c0_8, %c0_9, %c0_10] : memref<1x4x256xf32, #tpu.memory_space<vmem>>, vector<1x4x256xf32>
    %22 = vector.shape_cast %21 : vector<1x4x256xf32> to vector<4x256xf32>
    %23 = vector.shape_cast %20 : vector<4x256xf32> to vector<1x4x256xf32>
    tpu.vector_store %arg5[%c0_8, %c0_9, %c0_10], %23 {strides = array<i32>} : memref<1x4x256xf32, #tpu.memory_space<vmem>>, vector<1x4x256xf32>,
    return
  }
  func.func @transform_0(%arg0: i32, %arg1: i32) -> (i32, i32, i32) {
    %c0_i32 = arith.constant 0 : i32
    %c0_i32_0 = arith.constant 0 : i32
    return %arg0, %c0_i32, %arg1 : i32, i32, i32
  }
  func.func @transform_1(%arg0: i32, %arg1: i32) -> (i32, i32) {
    %c0_i32 = arith.constant 0 : i32
    %c0_i32_0 = arith.constant 0 : i32
    %c0_i32_1 = arith.constant 0 : i32
    return %c0_i32, %c0_i32_0 : i32, i32
  }
  func.func @transform_2(%arg0: i32, %arg1: i32) -> (i32, i32) {
    %c0_i32 = arith.constant 0 : i32
    %c0_i32_0 = arith.constant 0 : i32
    %c0_i32_1 = arith.constant 0 : i32
    return %c0_i32, %c0_i32_0 : i32, i32
  }
  func.func @transform_3(%arg0: i32, %arg1: i32) -> (i32, i32, i32) {
    %c0_i32 = arith.constant 0 : i32
    %c0_i32_0 = arith.constant 0 : i32
    return %arg0, %c0_i32, %arg1 : i32, i32, i32
  }
}

</mosaic_0001>

<llo_original>
// kernel: tpu_custom_call.1
$region0: #{tpu_custom_call.1}
  #allocation0 [shape = 'u32[]', space=smem, size = 0x4, offset = 0x4, fixed_abs, tag = 'smem constant byte address 0x4 - core index']
  #allocation1 [shape = 'u32[72,128]{1,0:T(1,128)}', space=vmem, size = 0x9000, scoped, tag = 'internal scratch']
  %s0 = inlined_call_operand.hbm [shape: f32[2,4,256], index: 0, kind: input, shape index: {}]
  %s1 = inlined_call_operand.vmem [shape: f32[4,1], index: 1, kind: input, shape index: {}]
  %s2 = inlined_call_operand.vmem [shape: f32[4,1], index: 2, kind: input, shape index: {}]
  %s3 = inlined_call_operand.hbm [shape: f32[2,4,256], index: 3, kind: output, shape index: {}]
  %s4 = sld [smem:[#allocation0]]
  $region49: #{tpu_custom_call.1} parent=0
    _
  %s6 = ssub.s32 1, %s4
  %s7 = scalar_select 0, %s6, %s4
  $region1: #{tpu_custom_call.1} parent=0
    #allocation2 [shape = 'u8[8192]{0}', space=vmem, size = 0x2000, scoped, tag = 'input window, operand 0']
    #allocation3 [shape = 's32[2]{0}', space=sflag, size = 0x8, scoped, tag = 'scoped memory for tpu_custom_call.1']
    #allocation4 [shape = 's32[2]{0}', space=sflag, size = 0x8, scoped, tag = 'scoped memory for tpu_custom_call.1']
    #allocation5 [shape = 'u8[8192]{0}', space=vmem, size = 0x2000, scoped, tag = 'output window, operand 0']
    %8 = vsyncpa [#allocation3], 0
    %s9 = scalar_lea.sflag [#allocation3], 1
    %10 = vsyncpa %s9, 0
    %11 = vsyncpa [#allocation4], 0
    %s12 = scalar_lea.sflag [#allocation4], 1
    %13 = vsyncpa %s12, 0
    loop: start=0, step=1, limit=4
    $region2: #{tpu_custom_call.1} parent=1 // loop_pre_header
      _
    $region3: #{tpu_custom_call.1} parent=1 // loop_header
      %s15 = sphi 0, %s19
      %p16 = scmp.ge.s32.totalorder %s15, 4
      %s22 = sphi 0, %s34
      %s23 = sphi 0, %s30
      %s24 = sphi 0, %s22
      %s25 = sphi 0, %s23
      %s26 = sphi 0, %s24
      %s27 = sphi 0, %s25
      %s39 = sphi 0, %s41
      %s42 = sphi 0, %s39
      %s43 = sphi 0, %s42
      %s59 = sphi 0, %s43
      %s63 = sphi 0, %s63
      %s65 = sphi 0, %s63
      %s66 = sphi 0, %s65
      %s80 = sphi 0, %s66
      %s84 = sphi 0, %s84
      %s86 = sphi 0, %s84
      %s87 = sphi 0, %s86
      %s101 = sphi 0, %s87
      %s109 = sphi 0, %s111
      %s112 = sphi 0, %s109
      %s113 = sphi 0, %s112
      %s129 = sphi 0, %s113
    $region4: #{tpu_custom_call.1} parent=1 // loop_header_branch
      %18 = sbr.rel (%p16) target = $region8
    $region5: #{tpu_custom_call.1} parent=1 // loop_body
      %s20 = ssub.s32 %s15, 1
      %s21 = ssub.s32 %s15, 2
      %s28 = sadd.s32 1, %s23
      %p29 = scmp.ge.s32.totalorder %s28, 1
      %s30 = scalar_select %p29, 0, %s28
      %s31 = sadd.s32 1, %s22
      %s32 = scalar_select %p29, %s31, %s22
      %p33 = scmp.ge.s32.totalorder %s32, 2
      %s34 = scalar_select %p33, 0, %s32
      %s35 = ssub.s32 %s22, %s34
      %s36 = ssub.s32 %s23, %s30
      %s37 = sor.u32 %s35, %s36
      %p38 = scmp.eq.s32.totalorder %s37, 0
      %s40 = sadd.s32 %s39, 1
      %s41 = scalar_select %p38, %s39, %s40
      %p44 = pneg %p38
      %p45 = scmp.eq.s32.totalorder %s15, 1
      %p46 = por %p44, %p45
      %p47 = scmp.ne.s32.totalorder %s39, %s42
      %p48 = scmp.eq.s32.totalorder %s15, 0
      %p49 = por %p47, %p48
      %p50 = scmp.ne.s32.totalorder %s39, %s42
      %p51 = scmp.eq.s32.totalorder %s20, 1
      %p52 = por %p50, %p51
      %p53 = scmp.ne.s32.totalorder %s42, %s43
      %p54 = scmp.eq.s32.totalorder %s20, 0
      %p55 = por %p53, %p54
      %p56 = scmp.ne.s32.totalorder %s42, %s43
      %p57 = scmp.eq.s32.totalorder %s21, 1
      %p58 = por %p56, %p57
      %p60 = scmp.ne.s32.totalorder %s43, %s59
      %p61 = scmp.eq.s32.totalorder %s21, 0
      %p62 = por %p60, %p61
      %s64 = sadd.s32 %s63, 1
      %p67 = scmp.eq.s32.totalorder %s15, 1
      %p68 = scmp.ne.s32.totalorder %s63, %s65
      %p69 = scmp.eq.s32.totalorder %s15, 0
      %p70 = por %p68, %p69
      %p71 = scmp.ne.s32.totalorder %s63, %s65
      %p72 = scmp.eq.s32.totalorder %s20, 1
      %p73 = por %p71, %p72
      %p74 = scmp.ne.s32.totalorder %s65, %s66
      %p75 = scmp.eq.s32.totalorder %s20, 0
      %p76 = por %p74, %p75
      %p77 = scmp.ne.s32.totalorder %s65, %s66
      %p78 = scmp.eq.s32.totalorder %s21, 1
      %p79 = por %p77, %p78
      %p81 = scmp.ne.s32.totalorder %s66, %s80
      %p82 = scmp.eq.s32.totalorder %s21, 0
      %p83 = por %p81, %p82
      %s85 = sadd.s32 %s84, 1
      %p88 = scmp.eq.s32.totalorder %s15, 1
      %p89 = scmp.ne.s32.totalorder %s84, %s86
      %p90 = scmp.eq.s32.totalorder %s15, 0
      %p91 = por %p89, %p90
      %p92 = scmp.ne.s32.totalorder %s84, %s86
      %p93 = scmp.eq.s32.totalorder %s20, 1
      %p94 = por %p92, %p93
      %p95 = scmp.ne.s32.totalorder %s86, %s87
      %p96 = scmp.eq.s32.totalorder %s20, 0
      %p97 = por %p95, %p96
      %p98 = scmp.ne.s32.totalorder %s86, %s87
      %p99 = scmp.eq.s32.totalorder %s21, 1
      %p100 = por %p98, %p99
      %p102 = scmp.ne.s32.totalorder %s87, %s101
      %p103 = scmp.eq.s32.totalorder %s21, 0
      %p104 = por %p102, %p103
      %s105 = ssub.s32 %s22, %s34
      %s106 = ssub.s32 %s23, %s30
      %s107 = sor.u32 %s105, %s106
      %p108 = scmp.eq.s32.totalorder %s107, 0
      %s110 = sadd.s32 %s109, 1
      %s111 = scalar_select %p108, %s109, %s110
      %p114 = pneg %p108
      %p115 = scmp.eq.s32.totalorder %s15, 1
      %p116 = por %p114, %p115
      %p117 = scmp.ne.s32.totalorder %s109, %s112
      %p118 = scmp.eq.s32.totalorder %s15, 0
      %p119 = por %p117, %p118
      %p120 = scmp.ne.s32.totalorder %s109, %s112
      %p121 = scmp.eq.s32.totalorder %s20, 1
      %p122 = por %p120, %p121
      %p123 = scmp.ne.s32.totalorder %s112, %s113
      %p124 = scmp.eq.s32.totalorder %s20, 0
      %p125 = por %p123, %p124
      %p126 = scmp.ne.s32.totalorder %s112, %s113
      %p127 = scmp.eq.s32.totalorder %s21, 1
      %p128 = por %p126, %p127
      %p130 = scmp.ne.s32.totalorder %s113, %s129
      %p131 = scmp.eq.s32.totalorder %s21, 0
      %p132 = por %p130, %p131
      %p133 = scmp.le.s32.totalorder 1, %s15
      %p134 = scmp.lt.s32.totalorder %s15, 3
      %p135 = pnand %p133, %p134
      %p136 = pneg %p135
      // Predicated region
      $region9: #{tpu_custom_call.1} parent=5 // pred_check
        _
      $region10: #{tpu_custom_call.1} parent=5 // pred_check_branch
        %138 = sbr.rel (%p135) target = $region12
      $region11: #{tpu_custom_call.1} parent=5 // pred_region
        %s139 = ssub.s32 %s15, 1
        // Predicated region
        $region13: #{tpu_custom_call.1} parent=11 // pred_check
          %p140 = pneg %p76
        $region14: #{tpu_custom_call.1} parent=11 // pred_check_branch
          %142 = sbr.rel (%p140) target = $region16
        $region15: #{tpu_custom_call.1} parent=11 // pred_region
          _
        $region16: #{tpu_custom_call.1} parent=11 // pred_fallthru
          _
        // Predicated region
        $region17: #{tpu_custom_call.1} parent=11 // pred_check
          %p143 = pneg %p97
        $region18: #{tpu_custom_call.1} parent=11 // pred_check_branch
          %145 = sbr.rel (%p143) target = $region20
        $region19: #{tpu_custom_call.1} parent=11 // pred_region
          _
        $region20: #{tpu_custom_call.1} parent=11 // pred_fallthru
          _
      $region12: #{tpu_custom_call.1} parent=5 // pred_fallthru
        _
      %p146 = scmp.lt.s32.totalorder %s15, 2
      // Predicated region
      $region21: #{tpu_custom_call.1} parent=5 // pred_check
        %p147 = pneg %p146
      $region22: #{tpu_custom_call.1} parent=5 // pred_check_branch
        %149 = sbr.rel (%p147) target = $region24
      $region23: #{tpu_custom_call.1} parent=5 // pred_region
        // Predicated region
        $region25: #{tpu_custom_call.1} parent=23 // pred_check
          %p150 = pneg %p49
        $region26: #{tpu_custom_call.1} parent=23 // pred_check_branch
          %152 = sbr.rel (%p150) target = $region28
        $region27: #{tpu_custom_call.1} parent=23 // pred_region
          %s153 = sand.u32 %s39, 1
          %s154 = scalar_lea.sflag [#allocation3], %s153
          %s155 = sand.u32 %s39, 1
          %s156 = smul.addr %s155, 8
          %s157 = scalar_lea.vmem [#allocation2], %s156
          %s158 = smul.u32 2, %s23
          %160 = vsyncadd %s154, 0
          %s161 = smul.addr %s22, 2
          %s162 = sadd.s32 %s158, %s161
          %s163 = smul.addr %s162, 4
          %s164 = scalar_lea.hbm %s0, %s163
          %s166 = sshll.u32 %s164, 4
          %s167 = int_to_ptr.hbm [resolvable:$true] %s166
          %s168 = sshll.u32 %s157, 4
          %s169 = int_to_ptr.vmem [resolvable:$true] %s168
          %171 = dma.hbm_to_vmem [thread:$0]  %s167, 128, %s169, %s154
        $region28: #{tpu_custom_call.1} parent=23 // pred_fallthru
          _
      $region24: #{tpu_custom_call.1} parent=5 // pred_fallthru
        _
      %p172 = scmp.le.s32.totalorder 1, %s15
      %p173 = scmp.lt.s32.totalorder %s15, 3
      %p174 = pnand %p172, %p173
      %p175 = pneg %p174
      // Predicated region
      $region29: #{tpu_custom_call.1} parent=5 // pred_check
        _
      $region30: #{tpu_custom_call.1} parent=5 // pred_check_branch
        %177 = sbr.rel (%p174) target = $region32
      $region31: #{tpu_custom_call.1} parent=5 // pred_region
        %s178 = ssub.s32 %s15, 1
        %s179 = sand.u32 %s42, 1
        %s180 = scalar_lea.sflag [#allocation3], %s179
        %s181 = sand.u32 %s42, 1
        %s182 = smul.addr %s181, 8
        %s183 = scalar_lea.vmem [#allocation2], %s182
        // Predicated region
        $region33: #{tpu_custom_call.1} parent=31 // pred_check
          %p184 = pneg %p55
        $region34: #{tpu_custom_call.1} parent=31 // pred_check_branch
          %186 = sbr.rel (%p184) target = $region36
        $region35: #{tpu_custom_call.1} parent=31 // pred_region
          %188 = dma.done %s180, 128
        $region36: #{tpu_custom_call.1} parent=31 // pred_fallthru
          _
        %s189 = sand.u32 %s42, 1
        %s190 = scalar_lea.sflag [#allocation3], %s189
        %s191 = sand.u32 %s42, 1
        %s192 = smul.addr %s191, 8
        %s193 = scalar_lea.vmem [#allocation2], %s192
        %p194 = pneg %p55
        %p195 = pneg %p52
        %p196 = pneg %p76
        %p197 = pneg %p73
        %p198 = pneg %p97
        %p199 = pneg %p94
        %p200 = pneg %p125
        %p201 = pneg %p122
        %s202 = sand.u32 %s112, 1
        %s203 = scalar_lea.sflag [#allocation4], %s202
        %s204 = sand.u32 %s112, 1
        %s205 = smul.addr %s204, 8
        %s206 = scalar_lea.vmem [#allocation5], %s205
        %s207 = smul.u32 2, %s25
        %s208 = smul.u32 2, %s25
        %v209 = vld [vmem:[%s183] sm:$0xff]
        %v210 = vmul.f32 %v209, %v209
        %212 = vst [vmem:[#allocation1] ss:$2 sm:$0xff] %v210
        %v213 = vld.sshfl [vmem:[#allocation1] sm:$0xff pattern:$0x75316420]
        %v214 = vld.sshfl [vmem:[#allocation1 + $0x8] sm:$0xff pattern:$0x75316420]
        %vm217 = vcmask 1043456
        %v218 = vsel %vm217, %v213, 0.0
        %v219 = vrot.slane %v218, 4
        %v220 = vadd.f32 %v218, %v219
        %v221 = vrot.slane %v220, 2
        %v222 = vadd.f32 %v220, %v221
        %v223 = vrot.slane %v222, 1
        %v224 = vadd.f32 %v222, %v223
        %v225 = vsel %vm217, %v214, 0.0
        %v226 = vrot.slane %v225, 4
        %v227 = vadd.f32 %v225, %v226
        %v228 = vrot.slane %v227, 2
        %v229 = vadd.f32 %v227, %v228
        %v230 = vrot.slane %v229, 1
        %v231 = vadd.f32 %v229, %v230
        %v232 = vrsqrt.pop %v224
        %v233 = vmul.f32 %v232, %v224
        %v234 = vmul.f32 %v233, %v232
        %v235 = vmul.f32 0.5, %v234
        %v236 = vsub.f32 1.5, %v235
        %v237 = vmul.f32 %v232, %v236
        %v238 = vmul.f32 %v224, %v237
        %vm239 = vcmp.eq.f32.partialorder %v224, inf
        %v240 = vsel %vm239, %v224, %v238
        %vm241 = vcmp.eq.f32.partialorder %v224, 0.0
        %v242 = vand.u32 %v224, 2147483648
        %v243 = vsel %vm241, %v242, %v240
        %v244 = vrsqrt.pop %v231
        %v245 = vmul.f32 %v244, %v231
        %v246 = vmul.f32 %v245, %v244
        %v247 = vmul.f32 0.5, %v246
        %v248 = vsub.f32 1.5, %v247
        %v249 = vmul.f32 %v244, %v248
        %v250 = vmul.f32 %v231, %v249
        %vm251 = vcmp.eq.f32.partialorder %v231, inf
        %v252 = vsel %vm251, %v231, %v250
        %vm253 = vcmp.eq.f32.partialorder %v231, 0.0
        %v254 = vand.u32 %v231, 2147483648
        %v255 = vsel %vm253, %v254, %v252
        %v256 = vadd.f32 %v243, 1e-06
        %v257 = vadd.f32 %v255, 1e-06
        %v258 = vrcp.pop %v256
        %v259 = vrcp.pop %v257
        %v260 = vmul.f32 %v256, %v258
        %v261 = vmul.f32 %v257, %v259
        %v262 = vsub.f32 2.0, %v260
        %v263 = vsub.f32 2.0, %v261
        %v264 = vmul.f32 %v258, %v262
        %v265 = vmul.f32 %v259, %v263
        %v266 = vld [vmem:[%s1] sm:$0xf]
        %268 = vset.pattern.permute.xlu0 0
        %269 = vperm.xlu0 %268, %v266
        %v270 = vpop.permute.xlu0 %269
        %v272 = vmul.f32 %v270, %v264
        %v273 = vmul.f32 %v270, %v265
        %v276 = vrot.slane %v273, 4
        %v277 = vsel %vm217, %v272, %v276
        %v279 = vmul.f32 %v209, %v277
        %v280 = vld [vmem:[%s2] sm:$0xf]
        %282 = vset.pattern.permute.xlu0 0
        %283 = vperm.xlu0 %282, %v280
        %v284 = vpop.permute.xlu0 %283
        %v286 = vunpack.c.l.s4 839922192
        %v287 = vunpack.c.0.s8 %v286
        %v288 = vperm.slane %v284, %v287
        %v290 = vadd.f32 %v279, %v288
        %291 = vst [vmem:[%s206] sm:$0xff] %v290
        %s292 = sand.u32 %s112, 1
        %s293 = scalar_lea.sflag [#allocation4], %s292
        %s294 = sand.u32 %s112, 1
        %s295 = smul.addr %s294, 8
        %s296 = scalar_lea.vmem [#allocation5], %s295
        // Predicated region
        $region37: #{tpu_custom_call.1} parent=31 // pred_check
          %p297 = pneg %p122
        $region38: #{tpu_custom_call.1} parent=31 // pred_check_branch
          %299 = sbr.rel (%p297) target = $region40
        $region39: #{tpu_custom_call.1} parent=31 // pred_region
          %s300 = smul.u32 2, %s25
          %302 = vsyncadd %s293, 0
          %s303 = smul.addr %s24, 2
          %s304 = sadd.s32 %s300, %s303
          %s305 = smul.addr %s304, 4
          %s306 = scalar_lea.hbm %s3, %s305
          %s308 = sshll.u32 %s296, 4
          %s309 = int_to_ptr.vmem [resolvable:$true] %s308
          %s310 = sshll.u32 %s306, 4
          %s311 = int_to_ptr.hbm [resolvable:$true] %s310
          %313 = dma.vmem_to_hbm [thread:$0]  %s309, 128, %s311, %s293
        $region40: #{tpu_custom_call.1} parent=31 // pred_fallthru
          _
      $region32: #{tpu_custom_call.1} parent=5 // pred_fallthru
        _
      %p314 = scmp.le.s32.totalorder 2, %s15
      // Predicated region
      $region41: #{tpu_custom_call.1} parent=5 // pred_check
        %p315 = pneg %p314
      $region42: #{tpu_custom_call.1} parent=5 // pred_check_branch
        %317 = sbr.rel (%p315) target = $region44
      $region43: #{tpu_custom_call.1} parent=5 // pred_region
        %s318 = ssub.s32 %s15, 2
        // Predicated region
        $region45: #{tpu_custom_call.1} parent=43 // pred_check
          %p319 = pneg %p128
        $region46: #{tpu_custom_call.1} parent=43 // pred_check_branch
          %321 = sbr.rel (%p319) target = $region48
        $region47: #{tpu_custom_call.1} parent=43 // pred_region
          %s322 = sand.u32 %s113, 1
          %s323 = scalar_lea.sflag [#allocation4], %s322
          %s324 = sand.u32 %s113, 1
          %s325 = smul.addr %s324, 8
          %s326 = scalar_lea.vmem [#allocation5], %s325
          %328 = dma.done %s323, 128
        $region48: #{tpu_custom_call.1} parent=43 // pred_fallthru
          _
      $region44: #{tpu_custom_call.1} parent=5 // pred_fallthru
        _
    $region6: #{tpu_custom_call.1} parent=1 // loop_footer
      %s19 = sadd.s32 1, %s15
    $region7: #{tpu_custom_call.1} parent=1 // loop_footer_branch
      %14 = sbr.rel target = $region3
    $region8: #{tpu_custom_call.1} parent=1 // loop_exit
      _
    %329 = vsyncpa [#allocation3], 1
    %s330 = scalar_lea.sflag [#allocation3], 1
    %331 = vsyncpa %s330, 1
    %332 = vsyncpa [#allocation4], 1
    %s333 = scalar_lea.sflag [#allocation4], 1
    %334 = vsyncpa %s333, 1

</llo_original>
